<compile_context>
chip_gen: v7x
topology: tpu7x:2x2x1
jax: 0.10.0
libtpu: 0.0.40
codegen_flags: <defaults>
</compile_context>

<pallas_src>
import functools

import jax
import jax.numpy as jnp
from jax.experimental import pallas as pl
from jax.experimental.pallas import tpu as pltpu

EPS = 1e-5


# ----------------------------------------------------------------------------- kernel --
def _fc_bn_relu_kernel(x_ref, w_ref, p_ref, o_ref, *, compute_dtype):
    # One grid step = one output-feature tile.  x (full batch x full in_dim) is
    # VMEM-resident via a constant index_map; only the contiguous weight slab streams
    # from HBM, so the matmul + BN epilogue are cheap filler under the weight DMA.
    x = x_ref[...].astype(compute_dtype)          # in-kernel cast: no separate XLA pass
    # w_ref is (tn, K): tn contiguous rows of the native [out_dim, in_dim] weight.
    # Contract the shared K axis (== x @ w_tile.T) with f32 accumulation on the MXU.
    y = jax.lax.dot_general(
        x, w_ref[...],
        dimension_numbers=(((1,), (1,)), ((), ())),
        preferred_element_type=jnp.float32)       # [B, tn] f32

    y = y + p_ref[0:1, :]                         # nn.Linear bias

    # BatchNorm1d (training-mode batch stats of the selected domain).  Every block
    # holds the FULL batch (B is never tiled) so the per-feature stats are exact.
    mean = jnp.mean(y, axis=0, keepdims=True)                       # [1, tn]
    var = jnp.mean((y - mean) * (y - mean), axis=0, keepdims=True)  # biased variance
    y = (y - mean) * jax.lax.rsqrt(var + EPS)     # rsqrt -> EUP slot, off the VALU path
    y = y * p_ref[1:2, :] + p_ref[2:3, :]         # gamma_d, beta_d (selected domain)

    o_ref[...] = jnp.maximum(y, 0.0).astype(o_ref.dtype)            # ReLU


# --------------------------------------------------------------------- hardware params --
@functools.lru_cache(maxsize=None)
def _hw_params():
    """Generation-aware (tile_budget, vmem_limit, min_tiles)."""
    vmem_cap = 64 * 1024 * 1024                   # conservative default (v7x per-TC VMEM)
    try:
        info = pltpu.get_tpu_info()
        vmem_cap = int(getattr(info, "vmem_capacity_bytes", vmem_cap)) or vmem_cap
    except Exception:
        pass
    if vmem_cap >= 96 * 1024 * 1024:
        # v5e / v6e: 128 MiB VMEM -> large tiles, fewest grid steps, weight DMA near
        # roofline.  (v5e's default scoped limit is only 16 MiB, so the explicit raise
        # of vmem_limit_bytes matters most there.)  Single TC -> min_tiles = 1.
        return 56 * 1024 * 1024, 96 * 1024 * 1024, 1
    # v7x (or unknown): 64 MiB physical VMEM -> conservative budget, and target >= 8
    # output tiles (when N allows) so the "parallel" axis shards across both TensorCores.
    return 28 * 1024 * 1024, 48 * 1024 * 1024, 8


def _pick_tn(B, K, N, w_bytes, tile_budget, min_tiles):
    """Output-feature tile width: divides N, multiple of 128, fits the VMEM budget,
    and (on v7x) yields enough grid steps for megacore sharding."""
    def cost(tn):
        return (2 * B * K * 4            # f32 x block (double-buffered by the pipeline)
                + 2 * K * tn * w_bytes   # weight slab (double-buffered)
                + 2 * B * tn * 4         # f32 output tile (double-buffered)
                + 2 * 3 * tn * 4)        # packed bias/gamma/beta tile

    if N % 128 != 0:
        return N                         # irregular N: single full block (correct, rare)

    cands = [tn for tn in range(128, N + 1, 128) if N % tn == 0]      # ascending
    fitting = [tn for tn in cands if cost(tn) <= tile_budget] or [cands[0]]

    # Largest fitting tile that still yields >= min_tiles grid steps.
    for tn in reversed(fitting):
        if N // tn >= min_tiles:
            return tn
    # Can't reach min_tiles: take the smallest fitting tile (most steps we can get);
    # every weight tile is a contiguous HBM slab, so small tn stays DMA-efficient.
    return fitting[0]


# ---------------------------------------------------------------------------- wrapper --
@functools.partial(jax.jit, static_argnames=("compute_dtype",))
def fc_bn_relu_domain(x, w_nk, params, *, compute_dtype=jnp.bfloat16):
    """Forward pass of FC_BN_ReLU_Domain.

    x:      [B, in_dim] f32 activations (B >= 2: BatchNorm needs batch statistics).
    w_nk:   [out_dim, in_dim] fc weight in its native nn.Linear layout, ALREADY cast
            to `compute_dtype` once at init (do NOT re-cast per call).
    params: [3, out_dim] f32: row 0 = fc bias, row 1 = gamma_d, row 2 = beta_d of the
            currently selected BN domain (set_bn_domain == picking these rows).
    Returns the f32 [B, out_dim] forward output.
    """
    B, K = x.shape
    N, K2 = w_nk.shape
    if K2 != K:
        raise ValueError(f"weight/in_dim mismatch: {w_nk.shape} vs in_dim={K}")
    if B < 2:
        raise ValueError("BatchNorm1d (training mode) needs more than 1 value per "
                         "channel: B must be >= 2.")
    if params.shape != (3, N):
        raise ValueError(f"params must be [3, {N}] (bias, gamma_d, beta_d)")

    if w_nk.dtype != jnp.dtype(compute_dtype):
        # Robustness fallback only; the intended contract is a one-time init conversion.
        w_nk = w_nk.astype(compute_dtype)

    w_bytes = jnp.dtype(compute_dtype).itemsize
    tile_budget, vmem_limit, min_tiles = _hw_params()
    tn = _pick_tn(B, K, N, w_bytes, tile_budget, min_tiles)
    assert N % tn == 0
    grid = (N // tn,)

    cost = pl.CostEstimate(
        flops=2 * B * K * N,
        transcendentals=N,  # one rsqrt per output feature
        bytes_accessed=K * N * w_bytes + B * K * 4 + B * N * 4 + 3 * N * 4,
    )

    kernel = functools.partial(_fc_bn_relu_kernel, compute_dtype=compute_dtype)

    return pl.pallas_call(
        kernel,
        out_shape=jax.ShapeDtypeStruct((B, N), jnp.float32),
        grid_spec=pltpu.PrefetchScalarGridSpec(
            num_scalar_prefetch=0,
            grid=grid,
            in_specs=[
                # Full x resident across all output tiles (constant block index ->
                # fetched once, never re-streamed per tile).
                pl.BlockSpec((B, K), lambda j: (0, 0)),
                # Weight stream: tn contiguous rows of the [N, K] weight per step ->
                # each tile is one contiguous HBM slab (full-rate DMA at any tn).
                pl.BlockSpec((tn, K), lambda j: (j, 0)),
                # Packed bias / gamma_d / beta_d: one small DMA per step instead of 3.
                pl.BlockSpec((3, tn), lambda j: (0, j)),
            ],
            out_specs=pl.BlockSpec((B, tn), lambda j: (0, j)),
        ),
        compiler_params=pltpu.CompilerParams(
            # Output-feature tiles are independent -> shards across the 2 TCs on v7x.
            dimension_semantics=("parallel",),
            vmem_limit_bytes=vmem_limit,
        ),
        cost_estimate=cost,
    )(x, w_nk, params)


# -------------------------------------------------------------------------- reference --
def reference(x, w_nk, bias, gamma, beta):
    y = x @ w_nk.T + bias
    mean = jnp.mean(y, axis=0, keepdims=True)
    var = jnp.mean((y - mean) ** 2, axis=0, keepdims=True)
    y = (y - mean) / jnp.sqrt(var + EPS)
    y = y * gamma + beta
    return jnp.maximum(y, 0.0)


# ------------------------------------------------------------------------------- demo --
if __name__ == "__main__":
    # Module config (small, deterministic).
    B, in_dim, out_dim, num_domains_bn = 8, 256, 256, 2
    bn_domain = 0  # set_bn_domain(0)

    key = jax.random.PRNGKey(0)
    kx, kw, kb, kg, kbeta = jax.random.split(key, 5)

    x = jax.random.normal(kx, (B, in_dim), dtype=jnp.float32)

    # nn.Linear(in_dim, out_dim): weight [out_dim, in_dim], bias [out_dim].
    bound = 1.0 / (in_dim ** 0.5)
    w = jax.random.uniform(kw, (out_dim, in_dim), jnp.float32, -bound, bound)
    b = jax.random.uniform(kb, (out_dim,), jnp.float32, -bound, bound)

    # BatchNormDomain: one BatchNorm1d(out_dim) per domain (default weight=1, bias=0;
    # perturbed deterministically so the affine transform is nontrivial).
    gammas = 1.0 + 0.1 * jax.random.normal(kg, (num_domains_bn, out_dim), jnp.float32)
    betas = 0.1 * jax.random.normal(kbeta, (num_domains_bn, out_dim), jnp.float32)

    # One-time init glue (outside the per-call path, per perf review):
    #   * fc weight stays in its native [out_dim, in_dim] layout, converted to bf16 ONCE,
    #   * set_bn_domain == selecting gamma/beta rows; packed with the fc bias into a
    #     single [3, out_dim] parameter slab.
    w_bf16 = jax.device_put(w.astype(jnp.bfloat16))
    params = jnp.stack([b, gammas[bn_domain], betas[bn_domain]], axis=0)   # [3, N] f32

    out = fc_bn_relu_domain(x, w_bf16, params)
    out = jax.block_until_ready(out)

    # Reference on the same bf16-rounded operands the kernel consumes (f32 accumulate),
    # isolating kernel correctness from the intentional bf16 weight/activation stream.
    x_r = x.astype(jnp.bfloat16).astype(jnp.float32)
    w_r = w.astype(jnp.bfloat16).astype(jnp.float32)
    ref = reference(x_r, w_r, b[None, :],
                    gammas[bn_domain][None, :], betas[bn_domain][None, :])

    assert out.shape == (B, out_dim)
    assert jnp.allclose(out, ref, atol=1e-3, rtol=1e-3), "mismatch vs reference"

    print("KERNEL_OK")
</pallas_src>

<mosaic_0001>
module attributes {stable_mosaic.version = 11 : i64} {
  func.func @_fc_bn_relu_kernel(%arg0: i32, %arg1: memref<8x256xf32, #tpu.memory_space<vmem>>, %arg2: memref<128x256xbf16, #tpu.memory_space<vmem>>, %arg3: memref<3x128xf32, #tpu.memory_space<vmem>>, %arg4: memref<8x128xf32, #tpu.memory_space<vmem>>) attributes {dimension_semantics = [#tpu.dimension_semantics<parallel>], iteration_bounds = array<i64: 2>, scalar_prefetch = 0 : i64, scratch_operands = 0 : i64, tpu.core_type = #tpu.core_type<tc>, window_params = [{pipeline_mode = #tpu.pipeline_mode<synchronous>, transform_indices = @transform_0, window_bounds = array<i64: 8, 256>}, {transform_indices = @transform_1, window_bounds = array<i64: 128, 256>}, {transform_indices = @transform_2, window_bounds = array<i64: 3, 128>}, {transform_indices = @transform_3, window_bounds = array<i64: 8, 128>}]} {
    %c0 = arith.constant 0 : index
    %c0_0 = arith.constant 0 : index
    %0 = vector.load %arg1[%c0, %c0_0] : memref<8x256xf32, #tpu.memory_space<vmem>>, vector<8x256xf32>
    %1 = arith.truncf %0 : vector<8x256xf32> to vector<8x256xbf16>
    %c0_1 = arith.constant 0 : index
    %c0_2 = arith.constant 0 : index
    %2 = vector.load %arg2[%c0_1, %c0_2] : memref<128x256xbf16, #tpu.memory_space<vmem>>, vector<128x256xbf16>
    %cst = arith.constant dense<0.000000e+00> : vector<8x128xf32>
    %3 = tpu.matmul %1, %2, %cst {dimension_numbers = #tpu.dot_dimension_numbers<[1], [1], [0], [0], [0, 0, 1, 0], [], []>} : vector<8x256xbf16>, vector<128x256xbf16>, vector<8x128xf32> -> vector<8x128xf32>
    %c0_3 = arith.constant 0 : index
    %c0_4 = arith.constant 0 : index
    %4 = vector.load %arg3[%c0_3, %c0_4] : memref<3x128xf32, #tpu.memory_space<vmem>>, vector<1x128xf32>
    %5 = vector.broadcast %4 : vector<1x128xf32> to vector<8x128xf32>
    %6 = arith.addf %3, %5 : vector<8x128xf32>
    %cst_5 = arith.constant dense<0.000000e+00> : vector<128xf32>
    %7 = vector.multi_reduction <add>, %6, %cst_5 [0] : vector<8x128xf32> to vector<128xf32>
    %8 = vector.shape_cast %7 : vector<128xf32> to vector<1x128xf32>
    %cst_6 = arith.constant 8.000000e+00 : f32
    %9 = vector.broadcast %cst_6 : f32 to vector<1x128xf32>
    %10 = arith.divf %8, %9 : vector<1x128xf32>
    %11 = vector.broadcast %10 : vector<1x128xf32> to vector<8x128xf32>
    %12 = arith.subf %6, %11 : vector<8x128xf32>
    %13 = vector.broadcast %10 : vector<1x128xf32> to vector<8x128xf32>
    %14 = arith.subf %6, %13 : vector<8x128xf32>
    %15 = arith.mulf %12, %14 : vector<8x128xf32>
    %cst_7 = arith.constant dense<0.000000e+00> : vector<128xf32>
    %16 = vector.multi_reduction <add>, %15, %cst_7 [0] : vector<8x128xf32> to vector<128xf32>
    %17 = vector.shape_cast %16 : vector<128xf32> to vector<1x128xf32>
    %cst_8 = arith.constant 8.000000e+00 : f32
    %18 = vector.broadcast %cst_8 : f32 to vector<1x128xf32>
    %19 = arith.divf %17, %18 : vector<1x128xf32>
    %20 = vector.broadcast %10 : vector<1x128xf32> to vector<8x128xf32>
    %21 = arith.subf %6, %20 : vector<8x128xf32>
    %cst_9 = arith.constant 9.99999974E-6 : f32
    %22 = vector.broadcast %cst_9 : f32 to vector<1x128xf32>
    %23 = arith.addf %19, %22 : vector<1x128xf32>
    %24 = math.rsqrt %23 : vector<1x128xf32>
    %25 = vector.broadcast %24 : vector<1x128xf32> to vector<8x128xf32>
    %26 = arith.mulf %21, %25 : vector<8x128xf32>
    %c1 = arith.constant 1 : index
    %c0_10 = arith.constant 0 : index
    %27 = vector.load %arg3[%c1, %c0_10] : memref<3x128xf32, #tpu.memory_space<vmem>>, vector<1x128xf32>
    %28 = vector.broadcast %27 : vector<1x128xf32> to vector<8x128xf32>
    %29 = arith.mulf %26, %28 : vector<8x128xf32>
    %c2 = arith.constant 2 : index
    %c0_11 = arith.constant 0 : index
    %30 = vector.load %arg3[%c2, %c0_11] : memref<3x128xf32, #tpu.memory_space<vmem>>, vector<1x128xf32>
    %31 = vector.broadcast %30 : vector<1x128xf32> to vector<8x128xf32>
    %32 = arith.addf %29, %31 : vector<8x128xf32>
    %cst_12 = arith.constant 0.000000e+00 : f32
    %33 = vector.broadcast %cst_12 : f32 to vector<8x128xf32>
    %34 = arith.maximumf %32, %33 : vector<8x128xf32>
    %c0_13 = arith.constant 0 : index
    %c0_14 = arith.constant 0 : index
    %35 = vector.load %arg4[%c0_13, %c0_14] : memref<8x128xf32, #tpu.memory_space<vmem>>, vector<8x128xf32>
    tpu.vector_store %arg4[%c0_13, %c0_14], %34 {strides = array<i32>} : memref<8x128xf32, #tpu.memory_space<vmem>>, vector<8x128xf32>,
    return
  }
  func.func @transform_0(%arg0: i32) -> (i32, i32) {
    %c0_i32 = arith.constant 0 : i32
    %c0_i32_0 = arith.constant 0 : i32
    %c0_i32_1 = arith.constant 0 : i32
    return %c0_i32, %c0_i32_0 : i32, i32
  }
  func.func @transform_1(%arg0: i32) -> (i32, i32) {
    %c0_i32 = arith.constant 0 : i32
    %c0_i32_0 = arith.constant 0 : i32
    return %arg0, %c0_i32 : i32, i32
  }
  func.func @transform_2(%arg0: i32) -> (i32, i32) {
    %c0_i32 = arith.constant 0 : i32
    %c0_i32_0 = arith.constant 0 : i32
    return %c0_i32, %arg0 : i32, i32
  }
  func.func @transform_3(%arg0: i32) -> (i32, i32) {
    %c0_i32 = arith.constant 0 : i32
    %c0_i32_0 = arith.constant 0 : i32
    return %c0_i32, %arg0 : i32, i32
  }
}

</mosaic_0001>

<llo_original>
// kernel: fc_bn_relu_domain.1
$region0: #{fc_bn_relu_domain.1}
  #allocation0 [shape = 'u32[]', space=smem, size = 0x4, offset = 0x4, fixed_abs, tag = 'smem constant byte address 0x4 - core index']
  #allocation1 [shape = 'u32[144,128]{1,0:T(1,128)}', space=vmem, size = 0x12000, scoped, tag = 'internal scratch']
  %s0 = inlined_call_operand.hbm [shape: f32[8,256], index: 0, kind: input, shape index: {}]
  %s1 = inlined_call_operand.hbm [shape: bf16[256,256], index: 1, kind: input, shape index: {}]
  %s2 = inlined_call_operand.hbm [shape: f32[3,256], index: 2, kind: input, shape index: {}]
  %s3 = inlined_call_operand.hbm [shape: f32[8,256], index: 3, kind: output, shape index: {}]
  %s4 = sld [smem:[#allocation0]]
  $region57: #{fc_bn_relu_domain.1} parent=0
    _
  %s6 = ssub.s32 1, %s4
  %s7 = scalar_select 0, %s6, %s4
  $region1: #{fc_bn_relu_domain.1} parent=0
    #allocation2 [shape = 'u8[8192]{0}', space=vmem, size = 0x2000, scoped, tag = 'input window, operand 0, single buffered']
    #allocation3 [shape = 's32[2]{0}', space=sflag, size = 0x8, scoped, tag = 'scoped memory for fc_bn_relu_domain.1']
    #allocation4 [shape = 's32[2]{0}', space=sflag, size = 0x8, scoped, tag = 'scoped memory for fc_bn_relu_domain.1']
    #allocation5 [shape = 'u8[131072]{0}', space=vmem, size = 0x20000, scoped, tag = 'input window, operand 1']
    #allocation6 [shape = 's32[2]{0}', space=sflag, size = 0x8, scoped, tag = 'scoped memory for fc_bn_relu_domain.1']
    #allocation7 [shape = 'u8[4096]{0}', space=vmem, size = 0x1000, scoped, tag = 'input window, operand 2']
    #allocation8 [shape = 'u8[8192]{0}', space=vmem, size = 0x2000, scoped, tag = 'output window, operand 0']
    %8 = vsyncpa [#allocation3], 0
    %9 = vsyncpa [#allocation6], 0
    %s10 = scalar_lea.sflag [#allocation6], 1
    %11 = vsyncpa %s10, 0
    %12 = vsyncpa [#allocation4], 0
    %s13 = scalar_lea.sflag [#allocation4], 1
    %14 = vsyncpa %s13, 0
    loop: start=0, step=1, limit=4
    $region2: #{fc_bn_relu_domain.1} parent=1 // loop_pre_header
      _
    $region3: #{fc_bn_relu_domain.1} parent=1 // loop_header
      %s16 = sphi 0, %s20
      %p17 = scmp.ge.s32.totalorder %s16, 4
      %s24 = sphi 0, %s24
      %s26 = sphi 0, %s24
      %s27 = sphi 0, %s26
      %s41 = sphi 0, %s27
      %s47 = sphi 0, %s49
      %s50 = sphi 0, %s47
      %s51 = sphi 0, %s50
      %s67 = sphi 0, %s51
      %s73 = sphi 0, %s75
      %s76 = sphi 0, %s73
      %s77 = sphi 0, %s76
      %s93 = sphi 0, %s77
      %s99 = sphi 0, %s101
      %s102 = sphi 0, %s99
      %s103 = sphi 0, %s102
      %s119 = sphi 0, %s103
    $region4: #{fc_bn_relu_domain.1} parent=1 // loop_header_branch
      %19 = sbr.rel (%p17) target = $region8
    $region5: #{fc_bn_relu_domain.1} parent=1 // loop_body
      %s21 = ssub.s32 %s16, 1
      %s22 = ssub.s32 %s16, 2
      %s23 = sadd.s32 %s16, 1
      %s25 = sadd.s32 %s24, 1
      %p28 = scmp.eq.s32.totalorder %s16, 1
      %p29 = scmp.ne.s32.totalorder %s24, %s26
      %p30 = scmp.eq.s32.totalorder %s16, 0
      %p31 = por %p29, %p30
      %p32 = scmp.ne.s32.totalorder %s24, %s26
      %p33 = scmp.eq.s32.totalorder %s21, 1
      %p34 = por %p32, %p33
      %p35 = scmp.ne.s32.totalorder %s26, %s27
      %p36 = scmp.eq.s32.totalorder %s21, 0
      %p37 = por %p35, %p36
      %p38 = scmp.ne.s32.totalorder %s26, %s27
      %p39 = scmp.eq.s32.totalorder %s22, 1
      %p40 = por %p38, %p39
      %p42 = scmp.ne.s32.totalorder %s27, %s41
      %p43 = scmp.eq.s32.totalorder %s22, 0
      %p44 = por %p42, %p43
      %s45 = ssub.s32 %s16, %s23
      %p46 = scmp.eq.s32.totalorder %s45, 0
      %s48 = sadd.s32 %s47, 1
      %s49 = scalar_select %p46, %s47, %s48
      %p52 = pneg %p46
      %p53 = scmp.eq.s32.totalorder %s16, 1
      %p54 = por %p52, %p53
      %p55 = scmp.ne.s32.totalorder %s47, %s50
      %p56 = scmp.eq.s32.totalorder %s16, 0
      %p57 = por %p55, %p56
      %p58 = scmp.ne.s32.totalorder %s47, %s50
      %p59 = scmp.eq.s32.totalorder %s21, 1
      %p60 = por %p58, %p59
      %p61 = scmp.ne.s32.totalorder %s50, %s51
      %p62 = scmp.eq.s32.totalorder %s21, 0
      %p63 = por %p61, %p62
      %p64 = scmp.ne.s32.totalorder %s50, %s51
      %p65 = scmp.eq.s32.totalorder %s22, 1
      %p66 = por %p64, %p65
      %p68 = scmp.ne.s32.totalorder %s51, %s67
      %p69 = scmp.eq.s32.totalorder %s22, 0
      %p70 = por %p68, %p69
      %s71 = ssub.s32 %s16, %s23
      %p72 = scmp.eq.s32.totalorder %s71, 0
      %s74 = sadd.s32 %s73, 1
      %s75 = scalar_select %p72, %s73, %s74
      %p78 = pneg %p72
      %p79 = scmp.eq.s32.totalorder %s16, 1
      %p80 = por %p78, %p79
      %p81 = scmp.ne.s32.totalorder %s73, %s76
      %p82 = scmp.eq.s32.totalorder %s16, 0
      %p83 = por %p81, %p82
      %p84 = scmp.ne.s32.totalorder %s73, %s76
      %p85 = scmp.eq.s32.totalorder %s21, 1
      %p86 = por %p84, %p85
      %p87 = scmp.ne.s32.totalorder %s76, %s77
      %p88 = scmp.eq.s32.totalorder %s21, 0
      %p89 = por %p87, %p88
      %p90 = scmp.ne.s32.totalorder %s76, %s77
      %p91 = scmp.eq.s32.totalorder %s22, 1
      %p92 = por %p90, %p91
      %p94 = scmp.ne.s32.totalorder %s77, %s93
      %p95 = scmp.eq.s32.totalorder %s22, 0
      %p96 = por %p94, %p95
      %s97 = ssub.s32 %s16, %s23
      %p98 = scmp.eq.s32.totalorder %s97, 0
      %s100 = sadd.s32 %s99, 1
      %s101 = scalar_select %p98, %s99, %s100
      %p104 = pneg %p98
      %p105 = scmp.eq.s32.totalorder %s16, 1
      %p106 = por %p104, %p105
      %p107 = scmp.ne.s32.totalorder %s99, %s102
      %p108 = scmp.eq.s32.totalorder %s16, 0
      %p109 = por %p107, %p108
      %p110 = scmp.ne.s32.totalorder %s99, %s102
      %p111 = scmp.eq.s32.totalorder %s21, 1
      %p112 = por %p110, %p111
      %p113 = scmp.ne.s32.totalorder %s102, %s103
      %p114 = scmp.eq.s32.totalorder %s21, 0
      %p115 = por %p113, %p114
      %p116 = scmp.ne.s32.totalorder %s102, %s103
      %p117 = scmp.eq.s32.totalorder %s22, 1
      %p118 = por %p116, %p117
      %p120 = scmp.ne.s32.totalorder %s103, %s119
      %p121 = scmp.eq.s32.totalorder %s22, 0
      %p122 = por %p120, %p121
      %p123 = scmp.le.s32.totalorder 1, %s16
      %p124 = scmp.lt.s32.totalorder %s16, 3
      %p125 = pnand %p123, %p124
      %p126 = pneg %p125
      // Predicated region
      $region9: #{fc_bn_relu_domain.1} parent=5 // pred_check
        _
      $region10: #{fc_bn_relu_domain.1} parent=5 // pred_check_branch
        %128 = sbr.rel (%p125) target = $region12
      $region11: #{fc_bn_relu_domain.1} parent=5 // pred_region
        %s129 = ssub.s32 %s16, 1
        // Predicated region
        $region13: #{fc_bn_relu_domain.1} parent=11 // pred_check
          %p130 = pneg %p37
        $region14: #{fc_bn_relu_domain.1} parent=11 // pred_check_branch
          %132 = sbr.rel (%p130) target = $region16
        $region15: #{fc_bn_relu_domain.1} parent=11 // pred_region
          %s134 = ssub.s32 256, 256
          %135 = vsyncadd [#allocation3], %s134
          %s137 = sshll.u32 [#allocation2], 4
          %s138 = int_to_ptr.vmem [resolvable:$true] %s137
          %140 = dma.hbm_to_vmem [thread:$0]  %s0, 256, %s138, [#allocation3]
        $region16: #{fc_bn_relu_domain.1} parent=11 // pred_fallthru
          _
      $region12: #{fc_bn_relu_domain.1} parent=5 // pred_fallthru
        _
      %p141 = scmp.lt.s32.totalorder %s16, 2
      // Predicated region
      $region17: #{fc_bn_relu_domain.1} parent=5 // pred_check
        %p142 = pneg %p141
      $region18: #{fc_bn_relu_domain.1} parent=5 // pred_check_branch
        %144 = sbr.rel (%p142) target = $region20
      $region19: #{fc_bn_relu_domain.1} parent=5 // pred_region
        // Predicated region
        $region21: #{fc_bn_relu_domain.1} parent=19 // pred_check
          %p145 = pneg %p57
        $region22: #{fc_bn_relu_domain.1} parent=19 // pred_check_branch
          %147 = sbr.rel (%p145) target = $region24
        $region23: #{fc_bn_relu_domain.1} parent=19 // pred_region
          %s148 = sand.u32 %s16, 1
          %s149 = scalar_lea.sflag [#allocation6], %s148
          %s150 = sand.u32 %s47, 1
          %s151 = smul.addr %s150, 128
          %s152 = scalar_lea.vmem [#allocation5], %s151
          %s153 = smul.u32 16, %s16
          %s155 = ssub.s32 2048, 2048
          %156 = vsyncadd %s149, %s155
          %s157 = smul.addr %s153, 2
          %s158 = smul.addr %s157, 64
          %s159 = scalar_lea.hbm %s1, %s158
          %s160 = sshll.u32 %s152, 4
          %s161 = int_to_ptr.vmem [resolvable:$true] %s160
          %166 = dma.hbm_to_vmem [thread:$0]  %s159, 2048, %s161, %s149, 128, 128, 8
        $region24: #{fc_bn_relu_domain.1} parent=19 // pred_fallthru
          _
        // Predicated region
        $region25: #{fc_bn_relu_domain.1} parent=19 // pred_check
          %p167 = pneg %p83
        $region26: #{fc_bn_relu_domain.1} parent=19 // pred_check_branch
          %169 = sbr.rel (%p167) target = $region28
        $region27: #{fc_bn_relu_domain.1} parent=19 // pred_region
          %s170 = sand.u32 %s16, 1
          %s171 = scalar_lea.sflag [#allocation6], %s170
          %s172 = sand.u32 %s73, 1
          %s173 = smul.addr %s172, 4
          %s174 = scalar_lea.vmem [#allocation7], %s173
          %s176 = ssub.s32 64, 64
          %177 = vsyncadd %s171, %s176
          %s178 = smul.addr %s16, 64
          %s179 = scalar_lea.hbm %s2, %s178
          %s181 = sshll.u32 %s174, 4
          %s182 = int_to_ptr.vmem [resolvable:$true] %s181
          %184 = dma.hbm_to_vmem [thread:$0]  %s179, 64, %s182, %s171
        $region28: #{fc_bn_relu_domain.1} parent=19 // pred_fallthru
          _
      $region20: #{fc_bn_relu_domain.1} parent=5 // pred_fallthru
        _
      %p185 = scmp.le.s32.totalorder 1, %s16
      %p186 = scmp.lt.s32.totalorder %s16, 3
      %p187 = pnand %p185, %p186
      %p188 = pneg %p187
      // Predicated region
      $region29: #{fc_bn_relu_domain.1} parent=5 // pred_check
        _
      $region30: #{fc_bn_relu_domain.1} parent=5 // pred_check_branch
        %190 = sbr.rel (%p187) target = $region32
      $region31: #{fc_bn_relu_domain.1} parent=5 // pred_region
        %s191 = ssub.s32 %s16, 1
        // Predicated region
        $region33: #{fc_bn_relu_domain.1} parent=31 // pred_check
          %p192 = pneg %p37
        $region34: #{fc_bn_relu_domain.1} parent=31 // pred_check_branch
          %194 = sbr.rel (%p192) target = $region36
        $region35: #{fc_bn_relu_domain.1} parent=31 // pred_region
          %195 = dma.done [#allocation3], 256
        $region36: #{fc_bn_relu_domain.1} parent=31 // pred_fallthru
          _
        %s196 = sand.u32 %s21, 1
        %s197 = scalar_lea.sflag [#allocation6], %s196
        %s198 = sand.u32 %s50, 1
        %s199 = smul.addr %s198, 128
        %s200 = scalar_lea.vmem [#allocation5], %s199
        // Predicated region
        $region37: #{fc_bn_relu_domain.1} parent=31 // pred_check
          %p201 = pneg %p63
        $region38: #{fc_bn_relu_domain.1} parent=31 // pred_check_branch
          %203 = sbr.rel (%p201) target = $region40
        $region39: #{fc_bn_relu_domain.1} parent=31 // pred_region
          %204 = dma.done %s197, 2048
        $region40: #{fc_bn_relu_domain.1} parent=31 // pred_fallthru
          _
        %s205 = sand.u32 %s21, 1
        %s206 = scalar_lea.sflag [#allocation6], %s205
        %s207 = sand.u32 %s76, 1
        %s208 = smul.addr %s207, 4
        %s209 = scalar_lea.vmem [#allocation7], %s208
        // Predicated region
        $region41: #{fc_bn_relu_domain.1} parent=31 // pred_check
          %p210 = pneg %p89
        $region42: #{fc_bn_relu_domain.1} parent=31 // pred_check_branch
          %212 = sbr.rel (%p210) target = $region44
        $region43: #{fc_bn_relu_domain.1} parent=31 // pred_region
          %213 = dma.done %s206, 64
        $region44: #{fc_bn_relu_domain.1} parent=31 // pred_fallthru
          _
        %p214 = pneg %p37
        %p215 = pneg %p34
        %s216 = sand.u32 %s21, 1
        %s217 = scalar_lea.sflag [#allocation6], %s216
        %s218 = sand.u32 %s50, 1
        %s219 = smul.addr %s218, 128
        %s220 = scalar_lea.vmem [#allocation5], %s219
        %p221 = pneg %p63
        %p222 = pneg %p60
        %s223 = sand.u32 %s21, 1
        %s224 = scalar_lea.sflag [#allocation6], %s223
        %s225 = sand.u32 %s76, 1
        %s226 = smul.addr %s225, 4
        %s227 = scalar_lea.vmem [#allocation7], %s226
        %p228 = pneg %p89
        %p229 = pneg %p86
        %p230 = pneg %p115
        %p231 = pneg %p112
        %s232 = sand.u32 %s102, 1
        %s233 = scalar_lea.sflag [#allocation4], %s232
        %s234 = sand.u32 %s102, 1
        %s235 = smul.addr %s234, 8
        %s236 = scalar_lea.vmem [#allocation8], %s235
        %s237 = smul.u32 16, %s21
        %v239 = vld [vmem:[#allocation2] sm:$0xff]
        %v240 = vld [vmem:[#allocation2 + $0x8] sm:$0xff]
        %v241 = vpack.c.bf16 %v239, %v239
        %v242 = vpack.c.bf16 %v240, %v240
        %v243 = vld [vmem:[%s200] sm:$0xff]
        %v244 = vld [vmem:[%s200 + $0x8] sm:$0xff]
        %v245 = vld [vmem:[%s200 + $0x10] sm:$0xff]
        %v246 = vld [vmem:[%s200 + $0x18] sm:$0xff]
        %v247 = vld [vmem:[%s200 + $0x20] sm:$0xff]
        %v248 = vld [vmem:[%s200 + $0x28] sm:$0xff]
        %v249 = vld [vmem:[%s200 + $0x30] sm:$0xff]
        %v250 = vld [vmem:[%s200 + $0x38] sm:$0xff]
        %v251 = vld [vmem:[%s200 + $0x40] sm:$0xff]
        %v252 = vld [vmem:[%s200 + $0x48] sm:$0xff]
        %v253 = vld [vmem:[%s200 + $0x50] sm:$0xff]
        %v254 = vld [vmem:[%s200 + $0x58] sm:$0xff]
        %v255 = vld [vmem:[%s200 + $0x60] sm:$0xff]
        %v256 = vld [vmem:[%s200 + $0x68] sm:$0xff]
        %v257 = vld [vmem:[%s200 + $0x70] sm:$0xff]
        %v258 = vld [vmem:[%s200 + $0x78] sm:$0xff]
        %v259 = vld [vmem:[%s209] sm:$0x1]
        %v260 = vlaneseq
        %v261 = vshrl.u32 %v260, 7
        %v262 = vsub.s32 0, %v261
        %v263 = vrot.slane %v259, %v262
        %v280 = vunpack.c.l.b16 %v243
        %v281 = vunpack.c.h.b16 %v243
        %v282 = vunpack.c.l.b16 %v244
        %v283 = vunpack.c.h.b16 %v244
        %v284 = vunpack.c.l.b16 %v245
        %v285 = vunpack.c.h.b16 %v245
        %v286 = vunpack.c.l.b16 %v246
        %v287 = vunpack.c.h.b16 %v246
        %v288 = vunpack.c.l.b16 %v247
        %v289 = vunpack.c.h.b16 %v247
        %v290 = vunpack.c.l.b16 %v248
        %v291 = vunpack.c.h.b16 %v248
        %v292 = vunpack.c.l.b16 %v249
        %v293 = vunpack.c.h.b16 %v249
        %v294 = vunpack.c.l.b16 %v250
        %v295 = vunpack.c.h.b16 %v250
        %v296 = vunpack.c.l.b16 %v251
        %v297 = vunpack.c.h.b16 %v251
        %v298 = vunpack.c.l.b16 %v252
        %v299 = vunpack.c.h.b16 %v252
        %v300 = vunpack.c.l.b16 %v253
        %v301 = vunpack.c.h.b16 %v253
        %v302 = vunpack.c.l.b16 %v254
        %v303 = vunpack.c.h.b16 %v254
        %v304 = vunpack.c.l.b16 %v255
        %v305 = vunpack.c.h.b16 %v255
        %v306 = vunpack.c.l.b16 %v256
        %v307 = vunpack.c.h.b16 %v256
        %v308 = vunpack.c.l.b16 %v257
        %v309 = vunpack.c.h.b16 %v257
        %v310 = vunpack.c.l.b16 %v258
        %v311 = vunpack.c.h.b16 %v258
        %v312 = vpack.c.b16 %v282, %v280
        %v313 = vpack.c.b16 %v283, %v281
        %v314 = vpack.c.b16 %v286, %v284
        %v315 = vpack.c.b16 %v287, %v285
        %v316 = vpack.c.b16 %v290, %v288
        %v317 = vpack.c.b16 %v291, %v289
        %v318 = vpack.c.b16 %v294, %v292
        %v319 = vpack.c.b16 %v295, %v293
        %v320 = vpack.c.b16 %v298, %v296
        %v321 = vpack.c.b16 %v299, %v297
        %v322 = vpack.c.b16 %v302, %v300
        %v323 = vpack.c.b16 %v303, %v301
        %v324 = vpack.c.b16 %v306, %v304
        %v325 = vpack.c.b16 %v307, %v305
        %v326 = vpack.c.b16 %v310, %v308
        %v327 = vpack.c.b16 %v311, %v309
        %344 = vmatprep.subr.bf16.mxu0 %v313
        %345 = vmatpush1.bf16.xpose.msra.mxu0 %v312
        %346 = vmatprep.subr.bf16.mxu0 %v315
        %347 = vmatpush1.bf16.xpose.msra.mxu0 %v314
        %348 = vmatprep.subr.bf16.mxu0 %v317
        %349 = vmatpush1.bf16.xpose.msra.mxu0 %v316
        %350 = vmatprep.subr.bf16.mxu0 %v319
        %351 = vmatpush1.bf16.xpose.msra.mxu0 %v318
        %352 = vmatprep.subr.bf16.mxu0 %v321
        %353 = vmatpush1.bf16.xpose.msra.mxu0 %v320
        %354 = vmatprep.subr.bf16.mxu0 %v323
        %355 = vmatpush1.bf16.xpose.msra.mxu0 %v322
        %356 = vmatprep.subr.bf16.mxu0 %v325
        %357 = vmatpush1.bf16.xpose.msra.mxu0 %v324
        %358 = vmatprep.subr.bf16.mxu0 %v327
        %359 = vmatpush1.bf16.xpose.msra.mxu0 %v326
        %360 = vmatprep.subr.bf16.mxu0 0
        %361 = vmatpush1.bf16.xpose.msra.mxu0 0
        %362 = vmatprep.subr.bf16.mxu0 0
        %363 = vmatpush1.bf16.xpose.msra.mxu0 0
        %364 = vmatprep.subr.bf16.mxu0 0
        %365 = vmatpush1.bf16.xpose.msra.mxu0 0
        %366 = vmatprep.subr.bf16.mxu0 0
        %367 = vmatpush1.bf16.xpose.msra.mxu0 0
        %368 = vmatprep.subr.bf16.mxu0 0
        %369 = vmatpush1.bf16.xpose.msra.mxu0 0
        %370 = vmatprep.subr.bf16.mxu0 0
        %371 = vmatpush1.bf16.xpose.msra.mxu0 0
        %372 = vmatprep.subr.bf16.mxu0 0
        %373 = vmatpush1.bf16.xpose.msra.mxu0 0
        %374 = vmatprep.subr.bf16.mxu0 0
        %375 = vmatpush1.bf16.xpose.msra.mxu0 0
        %376 = vmatprep.mubr.bf16.mxu0 %v242
        %377 = vmatmul.mubr.bf16.gmra.mrb[0].mxu0 %v241
        %v378 = vpop.f32.mrb[0].mxu0
        %v379 = vadd.f32 %v263, %v378
        %v380 = vpop.f32.mrb[0].mxu0
        %v381 = vpop.f32.mrb[0].mxu0
        %v382 = vpop.f32.mrb[0].mxu0
        %383 = vdwg.mxu0
        %v384 = vrot.slane %v379, 4
        %v385 = vadd.f32 %v379, %v384
        %v386 = vrot.slane %v385, 2
        %v387 = vadd.f32 %v385, %v386
        %v388 = vrot.slane %v387, 1
        %v389 = vadd.f32 %v387, %v388
        %v390 = vrcp.pop 8.0
        %v391 = vmul.f32 %v389, %v390
        %v392 = vsub.f32 %v379, %v391
        %v393 = vmul.f32 %v392, %v392
        %v394 = vrot.slane %v393, 4
        %v395 = vadd.f32 %v393, %v394
        %v396 = vrot.slane %v395, 2
        %v397 = vadd.f32 %v395, %v396
        %v398 = vrot.slane %v397, 1
        %v399 = vadd.f32 %v397, %v398
        %v400 = vmul.f32 %v399, %v390
        %v401 = vadd.f32 %v400, 1e-05
        %v402 = vrsqrt.pop %v401
        %v403 = vmul.f32 %v392, %v402
        %v404 = vld [vmem:[%s209 + $0x1] sm:$0x1]
        %v405 = vlaneseq
        %v406 = vshrl.u32 %v405, 7
        %v407 = vsub.s32 0, %v406
        %v408 = vrot.slane %v404, %v407
        %v409 = vmul.f32 %v403, %v408
        %v410 = vld [vmem:[%s209 + $0x2] sm:$0x1]
        %v411 = vlaneseq
        %v412 = vshrl.u32 %v411, 7
        %v413 = vsub.s32 0, %v412
        %v414 = vrot.slane %v410, %v413
        %v415 = vadd.f32 %v409, %v414
        %v416 = vmax.f32 %v415, 0.0
        %417 = vst [vmem:[%s236] sm:$0xff] %v416
        %s418 = sand.u32 %s102, 1
        %s419 = scalar_lea.sflag [#allocation4], %s418
        %s420 = sand.u32 %s102, 1
        %s421 = smul.addr %s420, 8
        %s422 = scalar_lea.vmem [#allocation8], %s421
        // Predicated region
        $region45: #{fc_bn_relu_domain.1} parent=31 // pred_check
          %p423 = pneg %p112
        $region46: #{fc_bn_relu_domain.1} parent=31 // pred_check_branch
          %425 = sbr.rel (%p423) target = $region48
        $region47: #{fc_bn_relu_domain.1} parent=31 // pred_region
          %s427 = ssub.s32 128, 128
          %428 = vsyncadd %s419, %s427
          %s429 = smul.addr %s21, 128
          %s430 = scalar_lea.hbm %s3, %s429
          %s432 = sshll.u32 %s422, 4
          %s433 = int_to_ptr.vmem [resolvable:$true] %s432
          %435 = dma.vmem_to_hbm [thread:$0]  %s433, 128, %s430, %s419
        $region48: #{fc_bn_relu_domain.1} parent=31 // pred_fallthru
          _
      $region32: #{fc_bn_relu_domain.1} parent=5 // pred_fallthru
        _
      %p436 = scmp.le.s32.totalorder 2, %s16
      // Predicated region
      $region49: #{fc_bn_relu_domain.1} parent=5 // pred_check
        %p437 = pneg %p436
      $region50: #{fc_bn_relu_domain.1} parent=5 // pred_check_branch
        %439 = sbr.rel (%p437) target = $region52
      $region51: #{fc_bn_relu_domain.1} parent=5 // pred_region
        %s440 = ssub.s32 %s16, 2
        // Predicated region
        $region53: #{fc_bn_relu_domain.1} parent=51 // pred_check
          %p441 = pneg %p118
        $region54: #{fc_bn_relu_domain.1} parent=51 // pred_check_branch
          %443 = sbr.rel (%p441) target = $region56
        $region55: #{fc_bn_relu_domain.1} parent=51 // pred_region
          %s444 = sand.u32 %s103, 1
          %s445 = scalar_lea.sflag [#allocation4], %s444
          %s446 = sand.u32 %s103, 1
          %s447 = smul.addr %s446, 8
          %s448 = scalar_lea.vmem [#allocation8], %s447
          %449 = dma.done %s445, 128
        $region56: #{fc_bn_relu_domain.1} parent=51 // pred_fallthru
          _
      $region52: #{fc_bn_relu_domain.1} parent=5 // pred_fallthru
        _
    $region6: #{fc_bn_relu_domain.1} parent=1 // loop_footer
      %s20 = sadd.s32 1, %s16
    $region7: #{fc_bn_relu_domain.1} parent=1 // loop_footer_branch
      %15 = sbr.rel target = $region3
    $region8: #{fc_bn_relu_domain.1} parent=1 // loop_exit
      _
    %450 = vsyncpa [#allocation3], 1
    %s451 = scalar_lea.sflag [#allocation3], 1
    %452 = vsyncpa %s451, 1
    %453 = vsyncpa [#allocation6], 1
    %s454 = scalar_lea.sflag [#allocation6], 1
    %455 = vsyncpa %s454, 1
    %456 = vsyncpa [#allocation4], 1
    %s457 = scalar_lea.sflag [#allocation4], 1
    %458 = vsyncpa %s457, 1

</llo_original>
